<compile_context>
chip_gen: v7x
topology: tpu7x:2x2x1
jax: 0.10.0
libtpu: 0.0.40
codegen_flags: <defaults>
</compile_context>

<pallas_src>
import functools

import jax
import jax.numpy as jnp
from jax import lax
from jax.experimental import pallas as pl
from jax.experimental.pallas import tpu as pltpu

_LN_EPS = 1e-5


# --------------------------------------------------------------------------------------
# Kernels
# --------------------------------------------------------------------------------------
def _ffn_kernel_resident(x_ref, w1_ref, b1_ref, w2_ref, b2_ref, g_ref, beta_ref, o_ref):
    """fc1 -> ReLU -> fc2 -> (+residual) -> LayerNorm with both weights resident in VMEM."""
    x = x_ref[...]
    # MXU feeds stay in the stored dtype (bf16 hits full rate); accumulate in f32.
    h = jnp.dot(x, w1_ref[...], preferred_element_type=jnp.float32) + b1_ref[...]
    h = jnp.maximum(h, 0.0)                                          # ReLU
    y = jnp.dot(h.astype(w2_ref.dtype), w2_ref[...],
                preferred_element_type=jnp.float32) + b2_ref[...]

    # dropout (eval mode -> identity) + residual, then LayerNorm over features.
    z = y + x.astype(jnp.float32)
    mean = jnp.mean(z, axis=-1, keepdims=True)
    var = jnp.mean(z * z, axis=-1, keepdims=True) - mean * mean      # single-pass variance
    o_ref[...] = ((z - mean) * lax.rsqrt(var + _LN_EPS) * g_ref[...]
                  + beta_ref[...]).astype(o_ref.dtype)


def _ffn_kernel_htiled(x_ref, w1_ref, b1_ref, w2_ref, b2_ref, g_ref, beta_ref, o_ref,
                       acc_ref):
    """H-tiled variant: acc += relu(x @ W1[:, k] + b1[k]) @ W2[k, :]; LN on the last H step."""
    k = pl.program_id(1)

    @pl.when(k == 0)
    def _():
        acc_ref[...] = jnp.zeros_like(acc_ref)

    x = x_ref[...]
    h = jnp.dot(x, w1_ref[...], preferred_element_type=jnp.float32) + b1_ref[...]
    h = jnp.maximum(h, 0.0)
    acc_ref[...] += jnp.dot(h.astype(w2_ref.dtype), w2_ref[...],
                            preferred_element_type=jnp.float32)

    @pl.when(k == pl.num_programs(1) - 1)
    def _():
        z = acc_ref[...] + b2_ref[...] + x.astype(jnp.float32)
        mean = jnp.mean(z, axis=-1, keepdims=True)
        var = jnp.mean(z * z, axis=-1, keepdims=True) - mean * mean
        o_ref[...] = ((z - mean) * lax.rsqrt(var + _LN_EPS) * g_ref[...]
                      + beta_ref[...]).astype(o_ref.dtype)


# --------------------------------------------------------------------------------------
# Hardware / tiling helpers
# --------------------------------------------------------------------------------------
@functools.lru_cache(maxsize=None)
def _vmem_capacity_bytes():
    try:
        return int(pltpu.get_tpu_info().vmem_capacity_bytes)
    except Exception:
        return 128 << 20                       # v5e/v6e default if query unavailable


def _default_tm():
    # 64 MiB/TC (v7x) -> 256-row tiles; 128 MiB (v5e/v6e) -> 512-row tiles.
    return 256 if _vmem_capacity_bytes() <= (64 << 20) else 512


def _round_up(x, m):
    return ((x + m - 1) // m) * m


def _estimate_vmem_bytes(tm, D, th, x_it, w_it, out_it):
    """Rough VMEM need for one grid step (th == H means resident weights)."""
    weights = 2 * 2 * D * th * w_it            # W1 + W2 blocks, double-buffered
    xio = 2 * tm * D * (x_it + out_it)         # x / out tiles, double-buffered
    small = 2 * (th + 3 * D) * 4               # b1 block, b2, gamma, beta (f32)
    inter = tm * th * 4 + 3 * tm * D * 4       # h + acc/z/out f32 intermediates
    return weights + xio + small + inter


def _pick_th(D, H, tm, x_it, w_it, out_it, budget):
    """Return H (weights resident) or the largest 128-multiple divisor of H that fits."""
    if H % 128 != 0:
        return H
    if _estimate_vmem_bytes(tm, D, H, x_it, w_it, out_it) <= budget:
        return H
    for th in range(H - 128, 0, -128):
        if H % th == 0 and _estimate_vmem_bytes(tm, D, th, x_it, w_it, out_it) <= budget:
            return th
    return 128


# --------------------------------------------------------------------------------------
# pallas_call builder (cached per static configuration)
# --------------------------------------------------------------------------------------
@functools.lru_cache(maxsize=None)
def _build_call(M, D, H, tm, th, in_dtype, w_dtype, out_dtype):
    in_dtype = jnp.dtype(in_dtype)
    w_dtype = jnp.dtype(w_dtype)
    out_dtype = jnp.dtype(out_dtype)

    cap = _vmem_capacity_bytes()
    est = _estimate_vmem_bytes(tm, D, th, in_dtype.itemsize, w_dtype.itemsize,
                               out_dtype.itemsize)
    vmem_limit = int(min(max(est * 3 // 2 + (4 << 20), 32 << 20), int(cap * 0.9)))

    grid_m = pl.cdiv(M, tm)
    cost = pl.CostEstimate(
        flops=4 * M * D * H + 10 * M * D,
        transcendentals=0,
        bytes_accessed=M * D * (in_dtype.itemsize + out_dtype.itemsize)
        + 2 * D * H * w_dtype.itemsize + (H + 3 * D) * 4,
    )

    if th >= H:
        # Resident weights, 1-D row grid (row axis "parallel" -> sharded over v7x's 2 TCs).
        grid = (grid_m,)
        in_specs = [
            pl.BlockSpec((tm, D), lambda i: (i, 0)),   # x tile (pipelined over rows)
            pl.BlockSpec((D, H), lambda i: (0, 0)),    # W1 (resident)
            pl.BlockSpec((1, H), lambda i: (0, 0)),    # b1 (f32)
            pl.BlockSpec((H, D), lambda i: (0, 0)),    # W2 (resident)
            pl.BlockSpec((1, D), lambda i: (0, 0)),    # b2 (f32)
            pl.BlockSpec((1, D), lambda i: (0, 0)),    # gamma (f32)
            pl.BlockSpec((1, D), lambda i: (0, 0)),    # beta (f32)
        ]
        out_specs = pl.BlockSpec((tm, D), lambda i: (i, 0))
        scratch_shapes = []
        kernel = _ffn_kernel_resident
        semantics = ("parallel",)
    else:
        # H-tiled: accumulate into a (tm, D) f32 scratch; finalize LN on the last H step.
        grid = (grid_m, H // th)
        in_specs = [
            pl.BlockSpec((tm, D), lambda i, k: (i, 0)),
            pl.BlockSpec((D, th), lambda i, k: (0, k)),
            pl.BlockSpec((1, th), lambda i, k: (0, k)),
            pl.BlockSpec((th, D), lambda i, k: (k, 0)),
            pl.BlockSpec((1, D), lambda i, k: (0, 0)),
            pl.BlockSpec((1, D), lambda i, k: (0, 0)),
            pl.BlockSpec((1, D), lambda i, k: (0, 0)),
        ]
        out_specs = pl.BlockSpec((tm, D), lambda i, k: (i, 0))
        scratch_shapes = [pltpu.VMEM((tm, D), jnp.float32)]
        kernel = _ffn_kernel_htiled
        semantics = ("parallel", "arbitrary")

    return pl.pallas_call(
        kernel,
        out_shape=jax.ShapeDtypeStruct((M, D), out_dtype),
        grid_spec=pltpu.PrefetchScalarGridSpec(
            num_scalar_prefetch=0,
            grid=grid,
            in_specs=in_specs,
            out_specs=out_specs,
            scratch_shapes=scratch_shapes,
        ),
        compiler_params=pltpu.CompilerParams(
            dimension_semantics=semantics,
            vmem_limit_bytes=vmem_limit,
        ),
        cost_estimate=cost,
    )


# --------------------------------------------------------------------------------------
# Public wrapper (jit-compatible)
# --------------------------------------------------------------------------------------
def feed_forward(x, w1, b1, w2, b2, gamma, beta, *, tm=None, th=None, use_bf16_mxu=False):
    """x: (B, S, D); w1: (D, H) [pre-transposed]; b1: (H,); w2: (H, D); b2/gamma/beta: (D,).

    Dropout is compiled with eval/inference semantics (identity).
    Safe to call inside jax.jit (no host syncs, shape-only Python logic).
    """
    B, S, D = x.shape
    H = w1.shape[1]
    M = B * S

    out_dtype = x.dtype
    if use_bf16_mxu and x.dtype == jnp.float32:
        # Feed the MXU in bf16 (f32 accumulation + f32 epilogue); output stays f32.
        x = x.astype(jnp.bfloat16)
        w1 = w1.astype(jnp.bfloat16)
        w2 = w2.astype(jnp.bfloat16)

    x_it = jnp.dtype(x.dtype).itemsize
    w_it = jnp.dtype(w1.dtype).itemsize
    o_it = jnp.dtype(out_dtype).itemsize

    # Row tile: MXU-friendly default, clamped to the (packed-)sublane-aligned extent of M;
    # the grid uses cdiv so the last tile may be partial (Pallas masks the store).
    if tm is None:
        tm = _default_tm()
    min_tile = {4: 8, 2: 16, 1: 32}.get(x_it, 8)
    if M <= min_tile:
        tm = M
    else:
        tm = max(min_tile, min(_round_up(tm, min_tile), _round_up(M, min_tile)))

    # Hidden-dim tile: resident weights when they fit ~75% of physical VMEM, else H-tiled.
    if th is None:
        budget = int(_vmem_capacity_bytes() * 0.75)
        th = _pick_th(D, H, tm, x_it, w_it, o_it, budget)
    elif th < H and (H % th != 0 or th % 128 != 0):
        raise ValueError("th must be a multiple of 128 that divides H")
    th = min(th, H)

    x2 = x.reshape(M, D)
    b1f = b1.astype(jnp.float32).reshape(1, H)
    b2f = b2.astype(jnp.float32).reshape(1, D)
    gf = gamma.astype(jnp.float32).reshape(1, D)
    bef = beta.astype(jnp.float32).reshape(1, D)

    call = _build_call(M, D, H, tm, th, x.dtype, w1.dtype, out_dtype)
    out = call(x2, w1, b1f, w2, b2f, gf, bef)
    return out.reshape(B, S, D)


# --------------------------------------------------------------------------------------
# Reference + self-test
# --------------------------------------------------------------------------------------
def _reference(x, w1, b1, w2, b2, gamma, beta):
    h = jnp.maximum(x @ w1 + b1, 0.0)
    y = h @ w2 + b2
    z = y + x
    mean = jnp.mean(z, axis=-1, keepdims=True)
    var = jnp.mean((z - mean) ** 2, axis=-1, keepdims=True)
    return (z - mean) / jnp.sqrt(var + _LN_EPS) * gamma + beta


if __name__ == "__main__":
    # Small shapes consistent with the module (dim -> D, hide_dim -> H).
    B, S, D, H = 2, 16, 256, 512

    key = jax.random.PRNGKey(0)
    kx, kw1, kb1, kw2, kb2 = jax.random.split(key, 5)

    x = jax.random.normal(kx, (B, S, D), dtype=jnp.float32)

    # Deterministic parameter init (Kaiming-uniform-ish scale, like nn.Linear defaults).
    lim1 = 1.0 / (D ** 0.5)
    lim2 = 1.0 / (H ** 0.5)
    w1 = jax.random.uniform(kw1, (D, H), minval=-lim1, maxval=lim1, dtype=jnp.float32)
    b1 = jax.random.uniform(kb1, (H,), minval=-lim1, maxval=lim1, dtype=jnp.float32)
    w2 = jax.random.uniform(kw2, (H, D), minval=-lim2, maxval=lim2, dtype=jnp.float32)
    b2 = jax.random.uniform(kb2, (D,), minval=-lim2, maxval=lim2, dtype=jnp.float32)
    gamma = jnp.ones((D,), dtype=jnp.float32)   # LayerNorm weight init
    beta = jnp.zeros((D,), dtype=jnp.float32)   # LayerNorm bias init

    ref32 = _reference(x, w1, b1, w2, b2, gamma, beta)

    # 1) f32, default (hardware-chosen, clamped) row tile, resident weights.
    out_a = jax.block_until_ready(feed_forward(x, w1, b1, w2, b2, gamma, beta))
    assert out_a.shape == (B, S, D)
    assert jnp.allclose(out_a, ref32, atol=1e-4, rtol=1e-4), "f32 mismatch vs reference"

    # 2) f32, non-divisible row tile (exercises the cdiv grid + masked last block).
    out_b = jax.block_until_ready(feed_forward(x, w1, b1, w2, b2, gamma, beta, tm=24))
    assert jnp.allclose(out_b, ref32, atol=1e-4, rtol=1e-4), "f32 partial-tile mismatch"

    # 3) f32, forced H-tiled path (accumulator + LN finalize on last H step).
    out_c = jax.block_until_ready(feed_forward(x, w1, b1, w2, b2, gamma, beta, th=128))
    assert jnp.allclose(out_c, ref32, atol=1e-4, rtol=1e-4), "f32 H-tiled mismatch"

    # 4) bf16 storage path (recommended for MXU throughput); compare against an f32
    #    reference built from the same bf16-rounded operands.
    xb = x.astype(jnp.bfloat16)
    w1b = w1.astype(jnp.bfloat16)
    w2b = w2.astype(jnp.bfloat16)
    ref_bf16 = _reference(xb.astype(jnp.float32), w1b.astype(jnp.float32), b1,
                          w2b.astype(jnp.float32), b2, gamma, beta)
    out_d = jax.block_until_ready(feed_forward(xb, w1b, b1, w2b, b2, gamma, beta))
    assert jnp.allclose(out_d.astype(jnp.float32), ref_bf16, atol=3e-2, rtol=3e-2), \
        "bf16 mismatch vs reference"

    # 5) f32 inputs with bf16 MXU feeds (flag), f32 output.
    out_e = jax.block_until_ready(
        feed_forward(x, w1, b1, w2, b2, gamma, beta, use_bf16_mxu=True))
    assert out_e.dtype == jnp.float32
    assert jnp.allclose(out_e, ref_bf16, atol=3e-2, rtol=3e-2), "bf16-MXU-feed mismatch"

    print("KERNEL_OK")
</pallas_src>

<mosaic_0001>
module attributes {stable_mosaic.version = 11 : i64} {
  func.func @_ffn_kernel_resident(%arg0: i32, %arg1: memref<32x256xf32, #tpu.memory_space<vmem>>, %arg2: memref<256x512xf32, #tpu.memory_space<vmem>>, %arg3: memref<1x512xf32, #tpu.memory_space<vmem>>, %arg4: memref<512x256xf32, #tpu.memory_space<vmem>>, %arg5: memref<1x256xf32, #tpu.memory_space<vmem>>, %arg6: memref<1x256xf32, #tpu.memory_space<vmem>>, %arg7: memref<1x256xf32, #tpu.memory_space<vmem>>, %arg8: memref<32x256xf32, #tpu.memory_space<vmem>>) attributes {dimension_semantics = [#tpu.dimension_semantics<parallel>], iteration_bounds = array<i64: 1>, scalar_prefetch = 0 : i64, scratch_operands = 0 : i64, tpu.core_type = #tpu.core_type<tc>, window_params = [{transform_indices = @transform_0, window_bounds = array<i64: 32, 256>}, {pipeline_mode = #tpu.pipeline_mode<synchronous>, transform_indices = @transform_1, window_bounds = array<i64: 256, 512>}, {pipeline_mode = #tpu.pipeline_mode<synchronous>, transform_indices = @transform_2, window_bounds = array<i64: 1, 512>}, {pipeline_mode = #tpu.pipeline_mode<synchronous>, transform_indices = @transform_3, window_bounds = array<i64: 512, 256>}, {pipeline_mode = #tpu.pipeline_mode<synchronous>, transform_indices = @transform_4, window_bounds = array<i64: 1, 256>}, {pipeline_mode = #tpu.pipeline_mode<synchronous>, transform_indices = @transform_5, window_bounds = array<i64: 1, 256>}, {pipeline_mode = #tpu.pipeline_mode<synchronous>, transform_indices = @transform_6, window_bounds = array<i64: 1, 256>}, {transform_indices = @transform_7, window_bounds = array<i64: 32, 256>}]} {
    %c0 = arith.constant 0 : index
    %c0_0 = arith.constant 0 : index
    %0 = vector.load %arg1[%c0, %c0_0] : memref<32x256xf32, #tpu.memory_space<vmem>>, vector<32x256xf32>
    %c0_1 = arith.constant 0 : index
    %c0_2 = arith.constant 0 : index
    %1 = vector.load %arg2[%c0_1, %c0_2] : memref<256x512xf32, #tpu.memory_space<vmem>>, vector<256x512xf32>
    %cst = arith.constant dense<0.000000e+00> : vector<32x512xf32>
    %2 = tpu.matmul %0, %1, %cst {dimension_numbers = #tpu.dot_dimension_numbers<[1], [0], [0], [1], [0, 0, 1, 1], [], []>} : vector<32x256xf32>, vector<256x512xf32>, vector<32x512xf32> -> vector<32x512xf32>
    %c0_3 = arith.constant 0 : index
    %c0_4 = arith.constant 0 : index
    %3 = vector.load %arg3[%c0_3, %c0_4] : memref<1x512xf32, #tpu.memory_space<vmem>>, vector<1x512xf32>
    %4 = vector.broadcast %3 : vector<1x512xf32> to vector<32x512xf32>
    %5 = arith.addf %2, %4 : vector<32x512xf32>
    %cst_5 = arith.constant 0.000000e+00 : f32
    %6 = vector.broadcast %cst_5 : f32 to vector<32x512xf32>
    %7 = arith.maximumf %5, %6 : vector<32x512xf32>
    %c0_6 = arith.constant 0 : index
    %c0_7 = arith.constant 0 : index
    %8 = vector.load %arg4[%c0_6, %c0_7] : memref<512x256xf32, #tpu.memory_space<vmem>>, vector<512x256xf32>
    %cst_8 = arith.constant dense<0.000000e+00> : vector<32x256xf32>
    %9 = tpu.matmul %7, %8, %cst_8 {dimension_numbers = #tpu.dot_dimension_numbers<[1], [0], [0], [1], [0, 0, 1, 1], [], []>} : vector<32x512xf32>, vector<512x256xf32>, vector<32x256xf32> -> vector<32x256xf32>
    %c0_9 = arith.constant 0 : index
    %c0_10 = arith.constant 0 : index
    %10 = vector.load %arg5[%c0_9, %c0_10] : memref<1x256xf32, #tpu.memory_space<vmem>>, vector<1x256xf32>
    %11 = vector.broadcast %10 : vector<1x256xf32> to vector<32x256xf32>
    %12 = arith.addf %9, %11 : vector<32x256xf32>
    %13 = arith.addf %12, %0 : vector<32x256xf32>
    %cst_11 = arith.constant dense<0.000000e+00> : vector<32xf32>
    %14 = vector.multi_reduction <add>, %13, %cst_11 [1] : vector<32x256xf32> to vector<32xf32>
    %15 = vector.shape_cast %14 : vector<32xf32> to vector<32x1xf32>
    %cst_12 = arith.constant 2.560000e+02 : f32
    %16 = vector.broadcast %cst_12 : f32 to vector<32x1xf32>
    %17 = arith.divf %15, %16 : vector<32x1xf32>
    %18 = arith.mulf %13, %13 : vector<32x256xf32>
    %cst_13 = arith.constant dense<0.000000e+00> : vector<32xf32>
    %19 = vector.multi_reduction <add>, %18, %cst_13 [1] : vector<32x256xf32> to vector<32xf32>
    %20 = vector.shape_cast %19 : vector<32xf32> to vector<32x1xf32>
    %cst_14 = arith.constant 2.560000e+02 : f32
    %21 = vector.broadcast %cst_14 : f32 to vector<32x1xf32>
    %22 = arith.divf %20, %21 : vector<32x1xf32>
    %23 = arith.mulf %17, %17 : vector<32x1xf32>
    %24 = arith.subf %22, %23 : vector<32x1xf32>
    %25 = vector.broadcast %17 : vector<32x1xf32> to vector<32x256xf32>
    %26 = arith.subf %13, %25 : vector<32x256xf32>
    %cst_15 = arith.constant 9.99999974E-6 : f32
    %27 = vector.broadcast %cst_15 : f32 to vector<32x1xf32>
    %28 = arith.addf %24, %27 : vector<32x1xf32>
    %29 = math.rsqrt %28 : vector<32x1xf32>
    %30 = vector.broadcast %29 : vector<32x1xf32> to vector<32x256xf32>
    %31 = arith.mulf %26, %30 : vector<32x256xf32>
    %c0_16 = arith.constant 0 : index
    %c0_17 = arith.constant 0 : index
    %32 = vector.load %arg6[%c0_16, %c0_17] : memref<1x256xf32, #tpu.memory_space<vmem>>, vector<1x256xf32>
    %33 = vector.broadcast %32 : vector<1x256xf32> to vector<32x256xf32>
    %34 = arith.mulf %31, %33 : vector<32x256xf32>
    %c0_18 = arith.constant 0 : index
    %c0_19 = arith.constant 0 : index
    %35 = vector.load %arg7[%c0_18, %c0_19] : memref<1x256xf32, #tpu.memory_space<vmem>>, vector<1x256xf32>
    %36 = vector.broadcast %35 : vector<1x256xf32> to vector<32x256xf32>
    %37 = arith.addf %34, %36 : vector<32x256xf32>
    %c0_20 = arith.constant 0 : index
    %c0_21 = arith.constant 0 : index
    %38 = vector.load %arg8[%c0_20, %c0_21] : memref<32x256xf32, #tpu.memory_space<vmem>>, vector<32x256xf32>
    tpu.vector_store %arg8[%c0_20, %c0_21], %37 {strides = array<i32>} : memref<32x256xf32, #tpu.memory_space<vmem>>, vector<32x256xf32>,
    return
  }
  func.func @transform_0(%arg0: i32) -> (i32, i32) {
    %c0_i32 = arith.constant 0 : i32
    %c0_i32_0 = arith.constant 0 : i32
    return %arg0, %c0_i32 : i32, i32
  }
  func.func @transform_1(%arg0: i32) -> (i32, i32) {
    %c0_i32 = arith.constant 0 : i32
    %c0_i32_0 = arith.constant 0 : i32
    %c0_i32_1 = arith.constant 0 : i32
    return %c0_i32, %c0_i32_0 : i32, i32
  }
  func.func @transform_2(%arg0: i32) -> (i32, i32) {
    %c0_i32 = arith.constant 0 : i32
    %c0_i32_0 = arith.constant 0 : i32
    %c0_i32_1 = arith.constant 0 : i32
    return %c0_i32, %c0_i32_0 : i32, i32
  }
  func.func @transform_3(%arg0: i32) -> (i32, i32) {
    %c0_i32 = arith.constant 0 : i32
    %c0_i32_0 = arith.constant 0 : i32
    %c0_i32_1 = arith.constant 0 : i32
    return %c0_i32, %c0_i32_0 : i32, i32
  }
  func.func @transform_4(%arg0: i32) -> (i32, i32) {
    %c0_i32 = arith.constant 0 : i32
    %c0_i32_0 = arith.constant 0 : i32
    %c0_i32_1 = arith.constant 0 : i32
    return %c0_i32, %c0_i32_0 : i32, i32
  }
  func.func @transform_5(%arg0: i32) -> (i32, i32) {
    %c0_i32 = arith.constant 0 : i32
    %c0_i32_0 = arith.constant 0 : i32
    %c0_i32_1 = arith.constant 0 : i32
    return %c0_i32, %c0_i32_0 : i32, i32
  }
  func.func @transform_6(%arg0: i32) -> (i32, i32) {
    %c0_i32 = arith.constant 0 : i32
    %c0_i32_0 = arith.constant 0 : i32
    %c0_i32_1 = arith.constant 0 : i32
    return %c0_i32, %c0_i32_0 : i32, i32
  }
  func.func @transform_7(%arg0: i32) -> (i32, i32) {
    %c0_i32 = arith.constant 0 : i32
    %c0_i32_0 = arith.constant 0 : i32
    return %arg0, %c0_i32 : i32, i32
  }
}

</mosaic_0001>

<llo_original>
// kernel: tpu_custom_call.1
$region0: #{tpu_custom_call.1}
  #allocation0 [shape = 'u32[]', space=smem, size = 0x4, offset = 0x4, fixed_abs, tag = 'smem constant byte address 0x4 - core index']
  #allocation1 [shape = 'u32[144,128]{1,0:T(1,128)}', space=vmem, size = 0x12000, scoped, tag = 'internal scratch']
  %s0 = inlined_call_operand.hbm [shape: f32[32,256], index: 0, kind: input, shape index: {}]
  %s1 = inlined_call_operand.hbm [shape: f32[256,512], index: 1, kind: input, shape index: {}]
  %s2 = inlined_call_operand.vmem [shape: f32[1,512], index: 2, kind: input, shape index: {}]
  %s3 = inlined_call_operand.hbm [shape: f32[512,256], index: 3, kind: input, shape index: {}]
  %s4 = inlined_call_operand.vmem [shape: f32[1,256], index: 4, kind: input, shape index: {}]
  %s5 = inlined_call_operand.vmem [shape: f32[1,256], index: 5, kind: input, shape index: {}]
  %s6 = inlined_call_operand.vmem [shape: f32[1,256], index: 6, kind: input, shape index: {}]
  %s7 = inlined_call_operand.hbm [shape: f32[32,256], index: 7, kind: output, shape index: {}]
  %s8 = sld [smem:[#allocation0]]
  $region50: #{tpu_custom_call.1} parent=0
    _
  %s10 = ssub.s32 1, %s8
  %s11 = scalar_select 0, %s10, %s8
  $region1: #{tpu_custom_call.1} parent=0
    #allocation2 [shape = 'u8[32768]{0}', space=vmem, size = 0x8000, scoped, tag = 'input window, operand 0, single buffered']
    #allocation3 [shape = 's32[1]{0}', space=sflag, size = 0x4, scoped, tag = 'scoped memory for tpu_custom_call.1']
    #allocation4 [shape = 's32[1]{0}', space=sflag, size = 0x4, scoped, tag = 'scoped memory for tpu_custom_call.1']
    #allocation5 [shape = 'u8[524288]{0}', space=vmem, size = 0x80000, scoped, tag = 'input window, operand 1, single buffered']
    #allocation6 [shape = 's32[1]{0}', space=sflag, size = 0x4, scoped, tag = 'scoped memory for tpu_custom_call.1']
    #allocation7 [shape = 'u8[524288]{0}', space=vmem, size = 0x80000, scoped, tag = 'input window, operand 3, single buffered']
    #allocation8 [shape = 'u8[32768]{0}', space=vmem, size = 0x8000, scoped, tag = 'output window, operand 0, single buffered']
    %12 = vsyncpa [#allocation3], 0
    %13 = vsyncpa [#allocation6], 0
    %14 = vsyncpa [#allocation4], 0
    // Predicated region
    $region2: #{tpu_custom_call.1} parent=1 // pred_check
      _
    $region3: #{tpu_custom_call.1} parent=1 // pred_check_branch
      %16 = sbr.rel (0) target = $region5
    $region4: #{tpu_custom_call.1} parent=1 // pred_region
      %s18 = ssub.s32 1024, 1024
      %19 = vsyncadd [#allocation3], %s18
      %s20 = sshll.u32 [#allocation2], 4
      %s21 = int_to_ptr.vmem [resolvable:$true] %s20
      %26 = dma.hbm_to_vmem [thread:$0]  %s0, 1024, %s21, [#allocation3], 256, 256, 16
    $region5: #{tpu_custom_call.1} parent=1 // pred_fallthru
      _
    // Predicated region
    $region6: #{tpu_custom_call.1} parent=1 // pred_check
      _
    $region7: #{tpu_custom_call.1} parent=1 // pred_check_branch
      %28 = sbr.rel (0) target = $region9
    $region8: #{tpu_custom_call.1} parent=1 // pred_region
      %s30 = ssub.s32 16384, 16384
      %31 = vsyncadd [#allocation6], %s30
      %s32 = sshll.u32 [#allocation5], 4
      %s33 = int_to_ptr.vmem [resolvable:$true] %s32
      %38 = dma.hbm_to_vmem [thread:$0]  %s1, 16384, %s33, [#allocation6], 512, 512, 32
    $region9: #{tpu_custom_call.1} parent=1 // pred_fallthru
      _
    // Predicated region
    $region10: #{tpu_custom_call.1} parent=1 // pred_check
      _
    $region11: #{tpu_custom_call.1} parent=1 // pred_check_branch
      %40 = sbr.rel (0) target = $region13
    $region12: #{tpu_custom_call.1} parent=1 // pred_region
      _
    $region13: #{tpu_custom_call.1} parent=1 // pred_fallthru
      _
    // Predicated region
    $region14: #{tpu_custom_call.1} parent=1 // pred_check
      _
    $region15: #{tpu_custom_call.1} parent=1 // pred_check_branch
      %42 = sbr.rel (0) target = $region17
    $region16: #{tpu_custom_call.1} parent=1 // pred_region
      %s44 = ssub.s32 16384, 16384
      %45 = vsyncadd [#allocation6], %s44
      %s46 = sshll.u32 [#allocation7], 4
      %s47 = int_to_ptr.vmem [resolvable:$true] %s46
      %52 = dma.hbm_to_vmem [thread:$0]  %s3, 16384, %s47, [#allocation6], 256, 256, 16
    $region17: #{tpu_custom_call.1} parent=1 // pred_fallthru
      _
    // Predicated region
    $region18: #{tpu_custom_call.1} parent=1 // pred_check
      _
    $region19: #{tpu_custom_call.1} parent=1 // pred_check_branch
      %54 = sbr.rel (0) target = $region21
    $region20: #{tpu_custom_call.1} parent=1 // pred_region
      _
    $region21: #{tpu_custom_call.1} parent=1 // pred_fallthru
      _
    // Predicated region
    $region22: #{tpu_custom_call.1} parent=1 // pred_check
      _
    $region23: #{tpu_custom_call.1} parent=1 // pred_check_branch
      %56 = sbr.rel (0) target = $region25
    $region24: #{tpu_custom_call.1} parent=1 // pred_region
      _
    $region25: #{tpu_custom_call.1} parent=1 // pred_fallthru
      _
    // Predicated region
    $region26: #{tpu_custom_call.1} parent=1 // pred_check
      _
    $region27: #{tpu_custom_call.1} parent=1 // pred_check_branch
      %58 = sbr.rel (0) target = $region29
    $region28: #{tpu_custom_call.1} parent=1 // pred_region
      _
    $region29: #{tpu_custom_call.1} parent=1 // pred_fallthru
      _
    // Predicated region
    $region30: #{tpu_custom_call.1} parent=1 // pred_check
      _
    $region31: #{tpu_custom_call.1} parent=1 // pred_check_branch
      %60 = sbr.rel (0) target = $region33
    $region32: #{tpu_custom_call.1} parent=1 // pred_region
      %61 = dma.done [#allocation3], 1024
    $region33: #{tpu_custom_call.1} parent=1 // pred_fallthru
      _
    // Predicated region
    $region34: #{tpu_custom_call.1} parent=1 // pred_check
      _
    $region35: #{tpu_custom_call.1} parent=1 // pred_check_branch
      %63 = sbr.rel (0) target = $region37
    $region36: #{tpu_custom_call.1} parent=1 // pred_region
      %64 = dma.done [#allocation6], 16384
    $region37: #{tpu_custom_call.1} parent=1 // pred_fallthru
      _
    // Predicated region
    $region38: #{tpu_custom_call.1} parent=1 // pred_check
      _
    $region39: #{tpu_custom_call.1} parent=1 // pred_check_branch
      %66 = sbr.rel (0) target = $region41
    $region40: #{tpu_custom_call.1} parent=1 // pred_region
      %67 = dma.done [#allocation6], 16384
    $region41: #{tpu_custom_call.1} parent=1 // pred_fallthru
      _
    %v68 = vld [vmem:[#allocation2] sm:$0xff]
    %v69 = vld [vmem:[#allocation2 + $0x8] sm:$0xff]
    %v70 = vld [vmem:[#allocation2 + $0x10] sm:$0xff]
    %v71 = vld [vmem:[#allocation2 + $0x18] sm:$0xff]
    %v72 = vld [vmem:[#allocation2 + $0x20] sm:$0xff]
    %v73 = vld [vmem:[#allocation2 + $0x28] sm:$0xff]
    %v74 = vld [vmem:[#allocation2 + $0x30] sm:$0xff]
    %v75 = vld [vmem:[#allocation2 + $0x38] sm:$0xff]
    %v76 = vld [vmem:[#allocation5] sm:$0xff]
    %v77 = vld [vmem:[#allocation5 + $0x8] sm:$0xff]
    %v78 = vld [vmem:[#allocation5 + $0x10] sm:$0xff]
    %v79 = vld [vmem:[#allocation5 + $0x18] sm:$0xff]
    %v80 = vld [vmem:[#allocation5 + $0x20] sm:$0xff]
    %v81 = vld [vmem:[#allocation5 + $0x28] sm:$0xff]
    %v82 = vld [vmem:[#allocation5 + $0x30] sm:$0xff]
    %v83 = vld [vmem:[#allocation5 + $0x38] sm:$0xff]
    %v84 = vld [vmem:[#allocation5 + $0x40] sm:$0xff]
    %v85 = vld [vmem:[#allocation5 + $0x48] sm:$0xff]
    %v86 = vld [vmem:[#allocation5 + $0x50] sm:$0xff]
    %v87 = vld [vmem:[#allocation5 + $0x58] sm:$0xff]
    %v88 = vld [vmem:[#allocation5 + $0x60] sm:$0xff]
    %v89 = vld [vmem:[#allocation5 + $0x68] sm:$0xff]
    %v90 = vld [vmem:[#allocation5 + $0x70] sm:$0xff]
    %v91 = vld [vmem:[#allocation5 + $0x78] sm:$0xff]
    %v92 = vld [vmem:[#allocation5 + $0x80] sm:$0xff]
    %v93 = vld [vmem:[#allocation5 + $0x88] sm:$0xff]
    %v94 = vld [vmem:[#allocation5 + $0x90] sm:$0xff]
    %v95 = vld [vmem:[#allocation5 + $0x98] sm:$0xff]
    %v96 = vld [vmem:[#allocation5 + $0xa0] sm:$0xff]
    %v97 = vld [vmem:[#allocation5 + $0xa8] sm:$0xff]
    %v98 = vld [vmem:[#allocation5 + $0xb0] sm:$0xff]
    %v99 = vld [vmem:[#allocation5 + $0xb8] sm:$0xff]
    %v100 = vld [vmem:[#allocation5 + $0xc0] sm:$0xff]
    %v101 = vld [vmem:[#allocation5 + $0xc8] sm:$0xff]
    %v102 = vld [vmem:[#allocation5 + $0xd0] sm:$0xff]
    %v103 = vld [vmem:[#allocation5 + $0xd8] sm:$0xff]
    %v104 = vld [vmem:[#allocation5 + $0xe0] sm:$0xff]
    %v105 = vld [vmem:[#allocation5 + $0xe8] sm:$0xff]
    %v106 = vld [vmem:[#allocation5 + $0xf0] sm:$0xff]
    %v107 = vld [vmem:[#allocation5 + $0xf8] sm:$0xff]
    %v108 = vld [vmem:[#allocation5 + $0x100] sm:$0xff]
    %v109 = vld [vmem:[#allocation5 + $0x108] sm:$0xff]
    %v110 = vld [vmem:[#allocation5 + $0x110] sm:$0xff]
    %v111 = vld [vmem:[#allocation5 + $0x118] sm:$0xff]
    %v112 = vld [vmem:[#allocation5 + $0x120] sm:$0xff]
    %v113 = vld [vmem:[#allocation5 + $0x128] sm:$0xff]
    %v114 = vld [vmem:[#allocation5 + $0x130] sm:$0xff]
    %v115 = vld [vmem:[#allocation5 + $0x138] sm:$0xff]
    %v116 = vld [vmem:[#allocation5 + $0x140] sm:$0xff]
    %v117 = vld [vmem:[#allocation5 + $0x148] sm:$0xff]
    %v118 = vld [vmem:[#allocation5 + $0x150] sm:$0xff]
    %v119 = vld [vmem:[#allocation5 + $0x158] sm:$0xff]
    %v120 = vld [vmem:[#allocation5 + $0x160] sm:$0xff]
    %v121 = vld [vmem:[#allocation5 + $0x168] sm:$0xff]
    %v122 = vld [vmem:[#allocation5 + $0x170] sm:$0xff]
    %v123 = vld [vmem:[#allocation5 + $0x178] sm:$0xff]
    %v124 = vld [vmem:[#allocation5 + $0x180] sm:$0xff]
    %v125 = vld [vmem:[#allocation5 + $0x188] sm:$0xff]
    %v126 = vld [vmem:[#allocation5 + $0x190] sm:$0xff]
    %v127 = vld [vmem:[#allocation5 + $0x198] sm:$0xff]
    %v128 = vld [vmem:[#allocation5 + $0x1a0] sm:$0xff]
    %v129 = vld [vmem:[#allocation5 + $0x1a8] sm:$0xff]
    %v130 = vld [vmem:[#allocation5 + $0x1b0] sm:$0xff]
    %v131 = vld [vmem:[#allocation5 + $0x1b8] sm:$0xff]
    %v132 = vld [vmem:[#allocation5 + $0x1c0] sm:$0xff]
    %v133 = vld [vmem:[#allocation5 + $0x1c8] sm:$0xff]
    %v134 = vld [vmem:[#allocation5 + $0x1d0] sm:$0xff]
    %v135 = vld [vmem:[#allocation5 + $0x1d8] sm:$0xff]
    %v136 = vld [vmem:[#allocation5 + $0x1e0] sm:$0xff]
    %v137 = vld [vmem:[#allocation5 + $0x1e8] sm:$0xff]
    %v138 = vld [vmem:[#allocation5 + $0x1f0] sm:$0xff]
    %v139 = vld [vmem:[#allocation5 + $0x1f8] sm:$0xff]
    %v140 = vld [vmem:[#allocation5 + $0x200] sm:$0xff]
    %v141 = vld [vmem:[#allocation5 + $0x208] sm:$0xff]
    %v142 = vld [vmem:[#allocation5 + $0x210] sm:$0xff]
    %v143 = vld [vmem:[#allocation5 + $0x218] sm:$0xff]
    %v144 = vld [vmem:[#allocation5 + $0x220] sm:$0xff]
    %v145 = vld [vmem:[#allocation5 + $0x228] sm:$0xff]
    %v146 = vld [vmem:[#allocation5 + $0x230] sm:$0xff]
    %v147 = vld [vmem:[#allocation5 + $0x238] sm:$0xff]
    %v148 = vld [vmem:[#allocation5 + $0x240] sm:$0xff]
    %v149 = vld [vmem:[#allocation5 + $0x248] sm:$0xff]
    %v150 = vld [vmem:[#allocation5 + $0x250] sm:$0xff]
    %v151 = vld [vmem:[#allocation5 + $0x258] sm:$0xff]
    %v152 = vld [vmem:[#allocation5 + $0x260] sm:$0xff]
    %v153 = vld [vmem:[#allocation5 + $0x268] sm:$0xff]
    %v154 = vld [vmem:[#allocation5 + $0x270] sm:$0xff]
    %v155 = vld [vmem:[#allocation5 + $0x278] sm:$0xff]
    %v156 = vld [vmem:[#allocation5 + $0x280] sm:$0xff]
    %v157 = vld [vmem:[#allocation5 + $0x288] sm:$0xff]
    %v158 = vld [vmem:[#allocation5 + $0x290] sm:$0xff]
    %v159 = vld [vmem:[#allocation5 + $0x298] sm:$0xff]
    %v160 = vld [vmem:[#allocation5 + $0x2a0] sm:$0xff]
    %v161 = vld [vmem:[#allocation5 + $0x2a8] sm:$0xff]
    %v162 = vld [vmem:[#allocation5 + $0x2b0] sm:$0xff]
    %v163 = vld [vmem:[#allocation5 + $0x2b8] sm:$0xff]
    %v164 = vld [vmem:[#allocation5 + $0x2c0] sm:$0xff]
    %v165 = vld [vmem:[#allocation5 + $0x2c8] sm:$0xff]
    %v166 = vld [vmem:[#allocation5 + $0x2d0] sm:$0xff]
    %v167 = vld [vmem:[#allocation5 + $0x2d8] sm:$0xff]
    %v168 = vld [vmem:[#allocation5 + $0x2e0] sm:$0xff]
    %v169 = vld [vmem:[#allocation5 + $0x2e8] sm:$0xff]
    %v170 = vld [vmem:[#allocation5 + $0x2f0] sm:$0xff]
    %v171 = vld [vmem:[#allocation5 + $0x2f8] sm:$0xff]
    %v172 = vld [vmem:[#allocation5 + $0x300] sm:$0xff]
    %v173 = vld [vmem:[#allocation5 + $0x308] sm:$0xff]
    %v174 = vld [vmem:[#allocation5 + $0x310] sm:$0xff]
    %v175 = vld [vmem:[#allocation5 + $0x318] sm:$0xff]
    %v176 = vld [vmem:[#allocation5 + $0x320] sm:$0xff]
    %v177 = vld [vmem:[#allocation5 + $0x328] sm:$0xff]
    %v178 = vld [vmem:[#allocation5 + $0x330] sm:$0xff]
    %v179 = vld [vmem:[#allocation5 + $0x338] sm:$0xff]
    %v180 = vld [vmem:[#allocation5 + $0x340] sm:$0xff]
    %v181 = vld [vmem:[#allocation5 + $0x348] sm:$0xff]
    %v182 = vld [vmem:[#allocation5 + $0x350] sm:$0xff]
    %v183 = vld [vmem:[#allocation5 + $0x358] sm:$0xff]
    %v184 = vld [vmem:[#allocation5 + $0x360] sm:$0xff]
    %v185 = vld [vmem:[#allocation5 + $0x368] sm:$0xff]
    %v186 = vld [vmem:[#allocation5 + $0x370] sm:$0xff]
    %v187 = vld [vmem:[#allocation5 + $0x378] sm:$0xff]
    %v188 = vld [vmem:[#allocation5 + $0x380] sm:$0xff]
    %v189 = vld [vmem:[#allocation5 + $0x388] sm:$0xff]
    %v190 = vld [vmem:[#allocation5 + $0x390] sm:$0xff]
    %v191 = vld [vmem:[#allocation5 + $0x398] sm:$0xff]
    %v192 = vld [vmem:[#allocation5 + $0x3a0] sm:$0xff]
    %v193 = vld [vmem:[#allocation5 + $0x3a8] sm:$0xff]
    %v194 = vld [vmem:[#allocation5 + $0x3b0] sm:$0xff]
    %v195 = vld [vmem:[#allocation5 + $0x3b8] sm:$0xff]
    %v196 = vld [vmem:[#allocation5 + $0x3c0] sm:$0xff]
    %v197 = vld [vmem:[#allocation5 + $0x3c8] sm:$0xff]
    %v198 = vld [vmem:[#allocation5 + $0x3d0] sm:$0xff]
    %v199 = vld [vmem:[#allocation5 + $0x3d8] sm:$0xff]
    %v200 = vld [vmem:[#allocation5 + $0x3e0] sm:$0xff]
    %v201 = vld [vmem:[#allocation5 + $0x3e8] sm:$0xff]
    %v202 = vld [vmem:[#allocation5 + $0x3f0] sm:$0xff]
    %v203 = vld [vmem:[#allocation5 + $0x3f8] sm:$0xff]
    %v204 = vld [vmem:[%s2] sm:$0xf]
    %v206 = vlaneseq
    %v207 = vshrl.u32 %v206, 7
    %v208 = vsub.s32 0, %v207
    %v209 = vrot.slane %v204, %v208
    %v210 = vlaneseq
    %v211 = vshrl.u32 %v210, 7
    %v212 = vsub.s32 1, %v211
    %v213 = vrot.slane %v204, %v212
    %v214 = vlaneseq
    %v215 = vshrl.u32 %v214, 7
    %v216 = vsub.s32 2, %v215
    %v217 = vrot.slane %v204, %v216
    %v218 = vlaneseq
    %v219 = vshrl.u32 %v218, 7
    %v220 = vsub.s32 3, %v219
    %v221 = vrot.slane %v204, %v220
    %226 = vmatprep.subr.mxu0 %v77
    %227 = vmatpush1.msra.mxu0 %v76
    %228 = vmatprep.subr.mxu0 %v81
    %229 = vmatpush1.msra.mxu0 %v80
    %230 = vmatprep.subr.mxu0 %v85
    %231 = vmatpush1.msra.mxu0 %v84
    %232 = vmatprep.subr.mxu0 %v89
    %233 = vmatpush1.msra.mxu0 %v88
    %234 = vmatprep.subr.mxu0 %v93
    %235 = vmatpush1.msra.mxu0 %v92
    %236 = vmatprep.subr.mxu0 %v97
    %237 = vmatpush1.msra.mxu0 %v96
    %238 = vmatprep.subr.mxu0 %v101
    %239 = vmatpush1.msra.mxu0 %v100
    %240 = vmatprep.subr.mxu0 %v105
    %241 = vmatpush1.msra.mxu0 %v104
    %242 = vmatprep.subr.mxu0 %v109
    %243 = vmatpush1.msra.mxu0 %v108
    %244 = vmatprep.subr.mxu0 %v113
    %245 = vmatpush1.msra.mxu0 %v112
    %246 = vmatprep.subr.mxu0 %v117
    %247 = vmatpush1.msra.mxu0 %v116
    %248 = vmatprep.subr.mxu0 %v121
    %249 = vmatpush1.msra.mxu0 %v120
    %250 = vmatprep.subr.mxu0 %v125
    %251 = vmatpush1.msra.mxu0 %v124
    %252 = vmatprep.subr.mxu0 %v129
    %253 = vmatpush1.msra.mxu0 %v128
    %254 = vmatprep.subr.mxu0 %v133
    %255 = vmatpush1.msra.mxu0 %v132
    %256 = vmatprep.subr.mxu0 %v137
    %257 = vmatpush1.msra.mxu0 %v136
    %258 = vmatprep.subr.mxu0 %v141
    %259 = vmatpush1.msra.mxu0 %v140
    %260 = vmatprep.subr.mxu0 %v145
    %261 = vmatpush1.msra.mxu0 %v144
    %262 = vmatprep.subr.mxu0 %v149
    %263 = vmatpush1.msra.mxu0 %v148
    %264 = vmatprep.subr.mxu0 %v153
    %265 = vmatpush1.msra.mxu0 %v152
    %266 = vmatprep.subr.mxu0 %v157
    %267 = vmatpush1.msra.mxu0 %v156
    %268 = vmatprep.subr.mxu0 %v161
    %269 = vmatpush1.msra.mxu0 %v160
    %270 = vmatprep.subr.mxu0 %v165
    %271 = vmatpush1.msra.mxu0 %v164
    %272 = vmatprep.subr.mxu0 %v169
    %273 = vmatpush1.msra.mxu0 %v168
    %274 = vmatprep.subr.mxu0 %v173
    %275 = vmatpush1.msra.mxu0 %v172
    %276 = vmatprep.subr.mxu0 %v177
    %277 = vmatpush1.msra.mxu0 %v176
    %278 = vmatprep.subr.mxu0 %v181
    %279 = vmatpush1.msra.mxu0 %v180
    %280 = vmatprep.subr.mxu0 %v185
    %281 = vmatpush1.msra.mxu0 %v184
    %282 = vmatprep.subr.mxu0 %v189
    %283 = vmatpush1.msra.mxu0 %v188
    %284 = vmatprep.subr.mxu0 %v193
    %285 = vmatpush1.msra.mxu0 %v192
    %286 = vmatprep.subr.mxu0 %v197
    %287 = vmatpush1.msra.mxu0 %v196
    %288 = vmatprep.subr.mxu0 %v201
    %289 = vmatpush1.msra.mxu0 %v200
    %290 = vmatprep.mubr.f32.mxu0 %v69
    %291 = vmatmul.mubr.f32.gmra.mrb[0].mxu0 %v68
    %v292 = vpop.f32.mrb[0].mxu0
    %v293 = vadd.f32 %v209, %v292
    %v294 = vpop.f32.mrb[0].mxu0
    %v295 = vadd.f32 %v213, %v294
    %296 = vmatprep.mubr.f32.mxu0 %v71
    %297 = vmatmul.mubr.f32.gmra.mrb[0].mxu0 %v70
    %v298 = vpop.f32.mrb[0].mxu0
    %v299 = vadd.f32 %v209, %v298
    %v300 = vpop.f32.mrb[0].mxu0
    %v301 = vadd.f32 %v213, %v300
    %302 = vmatprep.mubr.f32.mxu0 %v73
    %303 = vmatmul.mubr.f32.gmra.mrb[0].mxu0 %v72
    %v304 = vpop.f32.mrb[0].mxu0
    %v305 = vadd.f32 %v209, %v304
    %v306 = vpop.f32.mrb[0].mxu0
    %v307 = vadd.f32 %v213, %v306
    %308 = vmatprep.mubr.f32.mxu0 %v75
    %309 = vmatmul.mubr.f32.gmra.mrb[0].mxu0 %v74
    %v310 = vpop.f32.mrb[0].mxu0
    %v311 = vadd.f32 %v209, %v310
    %v312 = vpop.f32.mrb[0].mxu0
    %v313 = vadd.f32 %v213, %v312
    %314 = vdwg.mxu0
    %315 = vmatprep.subr.mxu0 %v79
    %316 = vmatpush1.msra.mxu0 %v78
    %317 = vmatprep.subr.mxu0 %v83
    %318 = vmatpush1.msra.mxu0 %v82
    %319 = vmatprep.subr.mxu0 %v87
    %320 = vmatpush1.msra.mxu0 %v86
    %321 = vmatprep.subr.mxu0 %v91
    %322 = vmatpush1.msra.mxu0 %v90
    %323 = vmatprep.subr.mxu0 %v95
    %324 = vmatpush1.msra.mxu0 %v94
    %325 = vmatprep.subr.mxu0 %v99
    %326 = vmatpush1.msra.mxu0 %v98
    %327 = vmatprep.subr.mxu0 %v103
    %328 = vmatpush1.msra.mxu0 %v102
    %329 = vmatprep.subr.mxu0 %v107
    %330 = vmatpush1.msra.mxu0 %v106
    %331 = vmatprep.subr.mxu0 %v111
    %332 = vmatpush1.msra.mxu0 %v110
    %333 = vmatprep.subr.mxu0 %v115
    %334 = vmatpush1.msra.mxu0 %v114
    %335 = vmatprep.subr.mxu0 %v119
    %336 = vmatpush1.msra.mxu0 %v118
    %337 = vmatprep.subr.mxu0 %v123
    %338 = vmatpush1.msra.mxu0 %v122
    %339 = vmatprep.subr.mxu0 %v127
    %340 = vmatpush1.msra.mxu0 %v126
    %341 = vmatprep.subr.mxu0 %v131
    %342 = vmatpush1.msra.mxu0 %v130
    %343 = vmatprep.subr.mxu0 %v135
    %344 = vmatpush1.msra.mxu0 %v134
    %345 = vmatprep.subr.mxu0 %v139
    %346 = vmatpush1.msra.mxu0 %v138
    %347 = vmatprep.subr.mxu0 %v143
    %348 = vmatpush1.msra.mxu0 %v142
    %349 = vmatprep.subr.mxu0 %v147
    %350 = vmatpush1.msra.mxu0 %v146
    %351 = vmatprep.subr.mxu0 %v151
    %352 = vmatpush1.msra.mxu0 %v150
    %353 = vmatprep.subr.mxu0 %v155
    %354 = vmatpush1.msra.mxu0 %v154
    %355 = vmatprep.subr.mxu0 %v159
    %356 = vmatpush1.msra.mxu0 %v158
    %357 = vmatprep.subr.mxu0 %v163
    %358 = vmatpush1.msra.mxu0 %v162
    %359 = vmatprep.subr.mxu0 %v167
    %360 = vmatpush1.msra.mxu0 %v166
    %361 = vmatprep.subr.mxu0 %v171
    %362 = vmatpush1.msra.mxu0 %v170
    %363 = vmatprep.subr.mxu0 %v175
    %364 = vmatpush1.msra.mxu0 %v174
    %365 = vmatprep.subr.mxu0 %v179
    %366 = vmatpush1.msra.mxu0 %v178
    %367 = vmatprep.subr.mxu0 %v183
    %368 = vmatpush1.msra.mxu0 %v182
    %369 = vmatprep.subr.mxu0 %v187
    %370 = vmatpush1.msra.mxu0 %v186
    %371 = vmatprep.subr.mxu0 %v191
    %372 = vmatpush1.msra.mxu0 %v190
    %373 = vmatprep.subr.mxu0 %v195
    %374 = vmatpush1.msra.mxu0 %v194
    %375 = vmatprep.subr.mxu0 %v199
    %376 = vmatpush1.msra.mxu0 %v198
    %377 = vmatprep.subr.mxu0 %v203
    %378 = vmatpush1.msra.mxu0 %v202
    %379 = vmatprep.mubr.f32.mxu0 %v69
    %380 = vmatmul.mubr.f32.gmra.mrb[0].mxu0 %v68
    %v381 = vpop.f32.mrb[0].mxu0
    %v382 = vadd.f32 %v217, %v381
    %v383 = vpop.f32.mrb[0].mxu0
    %v384 = vadd.f32 %v221, %v383
    %385 = vmatprep.mubr.f32.mxu0 %v71
    %386 = vmatmul.mubr.f32.gmra.mrb[0].mxu0 %v70
    %v387 = vpop.f32.mrb[0].mxu0
    %v388 = vadd.f32 %v217, %v387
    %v389 = vpop.f32.mrb[0].mxu0
    %v390 = vadd.f32 %v221, %v389
    %391 = vmatprep.mubr.f32.mxu0 %v73
    %392 = vmatmul.mubr.f32.gmra.mrb[0].mxu0 %v72
    %v393 = vpop.f32.mrb[0].mxu0
    %v394 = vadd.f32 %v217, %v393
    %v395 = vpop.f32.mrb[0].mxu0
    %v396 = vadd.f32 %v221, %v395
    %397 = vmatprep.mubr.f32.mxu0 %v75
    %398 = vmatmul.mubr.f32.gmra.mrb[0].mxu0 %v74
    %v399 = vpop.f32.mrb[0].mxu0
    %v400 = vadd.f32 %v217, %v399
    %v401 = vpop.f32.mrb[0].mxu0
    %v402 = vadd.f32 %v221, %v401
    %403 = vdwg.mxu0
    %v404 = vmax.f32 %v293, 0.0
    %v405 = vmax.f32 %v295, 0.0
    %v406 = vmax.f32 %v382, 0.0
    %v407 = vmax.f32 %v384, 0.0
    %v408 = vmax.f32 %v299, 0.0
    %v409 = vmax.f32 %v301, 0.0
    %v410 = vmax.f32 %v388, 0.0
    %v411 = vmax.f32 %v390, 0.0
    %v412 = vmax.f32 %v305, 0.0
    %v413 = vmax.f32 %v307, 0.0
    %v414 = vmax.f32 %v394, 0.0
    %v415 = vmax.f32 %v396, 0.0
    %v416 = vmax.f32 %v311, 0.0
    %v417 = vmax.f32 %v313, 0.0
    %v418 = vmax.f32 %v400, 0.0
    %v419 = vmax.f32 %v402, 0.0
    %v420 = vld [vmem:[#allocation7] sm:$0xff]
    %v421 = vld [vmem:[#allocation7 + $0x8] sm:$0xff]
    %v422 = vld [vmem:[#allocation7 + $0x10] sm:$0xff]
    %v423 = vld [vmem:[#allocation7 + $0x18] sm:$0xff]
    %v424 = vld [vmem:[#allocation7 + $0x20] sm:$0xff]
    %v425 = vld [vmem:[#allocation7 + $0x28] sm:$0xff]
    %v426 = vld [vmem:[#allocation7 + $0x30] sm:$0xff]
    %v427 = vld [vmem:[#allocation7 + $0x38] sm:$0xff]
    %v428 = vld [vmem:[#allocation7 + $0x40] sm:$0xff]
    %v429 = vld [vmem:[#allocation7 + $0x48] sm:$0xff]
    %v430 = vld [vmem:[#allocation7 + $0x50] sm:$0xff]
    %v431 = vld [vmem:[#allocation7 + $0x58] sm:$0xff]
    %v432 = vld [vmem:[#allocation7 + $0x60] sm:$0xff]
    %v433 = vld [vmem:[#allocation7 + $0x68] sm:$0xff]
    %v434 = vld [vmem:[#allocation7 + $0x70] sm:$0xff]
    %v435 = vld [vmem:[#allocation7 + $0x78] sm:$0xff]
    %v436 = vld [vmem:[#allocation7 + $0x80] sm:$0xff]
    %v437 = vld [vmem:[#allocation7 + $0x88] sm:$0xff]
    %v438 = vld [vmem:[#allocation7 + $0x90] sm:$0xff]
    %v439 = vld [vmem:[#allocation7 + $0x98] sm:$0xff]
    %v440 = vld [vmem:[#allocation7 + $0xa0] sm:$0xff]
    %v441 = vld [vmem:[#allocation7 + $0xa8] sm:$0xff]
    %v442 = vld [vmem:[#allocation7 + $0xb0] sm:$0xff]
    %v443 = vld [vmem:[#allocation7 + $0xb8] sm:$0xff]
    %v444 = vld [vmem:[#allocation7 + $0xc0] sm:$0xff]
    %v445 = vld [vmem:[#allocation7 + $0xc8] sm:$0xff]
    %v446 = vld [vmem:[#allocation7 + $0xd0] sm:$0xff]
    %v447 = vld [vmem:[#allocation7 + $0xd8] sm:$0xff]
    %v448 = vld [vmem:[#allocation7 + $0xe0] sm:$0xff]
    %v449 = vld [vmem:[#allocation7 + $0xe8] sm:$0xff]
    %v450 = vld [vmem:[#allocation7 + $0xf0] sm:$0xff]
    %v451 = vld [vmem:[#allocation7 + $0xf8] sm:$0xff]
    %v452 = vld [vmem:[#allocation7 + $0x100] sm:$0xff]
    %v453 = vld [vmem:[#allocation7 + $0x108] sm:$0xff]
    %v454 = vld [vmem:[#allocation7 + $0x110] sm:$0xff]
    %v455 = vld [vmem:[#allocation7 + $0x118] sm:$0xff]
    %v456 = vld [vmem:[#allocation7 + $0x120] sm:$0xff]
    %v457 = vld [vmem:[#allocation7 + $0x128] sm:$0xff]
    %v458 = vld [vmem:[#allocation7 + $0x130] sm:$0xff]
    %v459 = vld [vmem:[#allocation7 + $0x138] sm:$0xff]
    %v460 = vld [vmem:[#allocation7 + $0x140] sm:$0xff]
    %v461 = vld [vmem:[#allocation7 + $0x148] sm:$0xff]
    %v462 = vld [vmem:[#allocation7 + $0x150] sm:$0xff]
    %v463 = vld [vmem:[#allocation7 + $0x158] sm:$0xff]
    %v464 = vld [vmem:[#allocation7 + $0x160] sm:$0xff]
    %v465 = vld [vmem:[#allocation7 + $0x168] sm:$0xff]
    %v466 = vld [vmem:[#allocation7 + $0x170] sm:$0xff]
    %v467 = vld [vmem:[#allocation7 + $0x178] sm:$0xff]
    %v468 = vld [vmem:[#allocation7 + $0x180] sm:$0xff]
    %v469 = vld [vmem:[#allocation7 + $0x188] sm:$0xff]
    %v470 = vld [vmem:[#allocation7 + $0x190] sm:$0xff]
    %v471 = vld [vmem:[#allocation7 + $0x198] sm:$0xff]
    %v472 = vld [vmem:[#allocation7 + $0x1a0] sm:$0xff]
    %v473 = vld [vmem:[#allocation7 + $0x1a8] sm:$0xff]
    %v474 = vld [vmem:[#allocation7 + $0x1b0] sm:$0xff]
    %v475 = vld [vmem:[#allocation7 + $0x1b8] sm:$0xff]
    %v476 = vld [vmem:[#allocation7 + $0x1c0] sm:$0xff]
    %v477 = vld [vmem:[#allocation7 + $0x1c8] sm:$0xff]
    %v478 = vld [vmem:[#allocation7 + $0x1d0] sm:$0xff]
    %v479 = vld [vmem:[#allocation7 + $0x1d8] sm:$0xff]
    %v480 = vld [vmem:[#allocation7 + $0x1e0] sm:$0xff]
    %v481 = vld [vmem:[#allocation7 + $0x1e8] sm:$0xff]
    %v482 = vld [vmem:[#allocation7 + $0x1f0] sm:$0xff]
    %v483 = vld [vmem:[#allocation7 + $0x1f8] sm:$0xff]
    %v484 = vld [vmem:[#allocation7 + $0x200] sm:$0xff]
    %v485 = vld [vmem:[#allocation7 + $0x208] sm:$0xff]
    %v486 = vld [vmem:[#allocation7 + $0x210] sm:$0xff]
    %v487 = vld [vmem:[#allocation7 + $0x218] sm:$0xff]
    %v488 = vld [vmem:[#allocation7 + $0x220] sm:$0xff]
    %v489 = vld [vmem:[#allocation7 + $0x228] sm:$0xff]
    %v490 = vld [vmem:[#allocation7 + $0x230] sm:$0xff]
    %v491 = vld [vmem:[#allocation7 + $0x238] sm:$0xff]
    %v492 = vld [vmem:[#allocation7 + $0x240] sm:$0xff]
    %v493 = vld [vmem:[#allocation7 + $0x248] sm:$0xff]
    %v494 = vld [vmem:[#allocation7 + $0x250] sm:$0xff]
    %v495 = vld [vmem:[#allocation7 + $0x258] sm:$0xff]
    %v496 = vld [vmem:[#allocation7 + $0x260] sm:$0xff]
    %v497 = vld [vmem:[#allocation7 + $0x268] sm:$0xff]
    %v498 = vld [vmem:[#allocation7 + $0x270] sm:$0xff]
    %v499 = vld [vmem:[#allocation7 + $0x278] sm:$0xff]
    %v500 = vld [vmem:[#allocation7 + $0x280] sm:$0xff]
    %v501 = vld [vmem:[#allocation7 + $0x288] sm:$0xff]
    %v502 = vld [vmem:[#allocation7 + $0x290] sm:$0xff]
    %v503 = vld [vmem:[#allocation7 + $0x298] sm:$0xff]
    %v504 = vld [vmem:[#allocation7 + $0x2a0] sm:$0xff]
    %v505 = vld [vmem:[#allocation7 + $0x2a8] sm:$0xff]
    %v506 = vld [vmem:[#allocation7 + $0x2b0] sm:$0xff]
    %v507 = vld [vmem:[#allocation7 + $0x2b8] sm:$0xff]
    %v508 = vld [vmem:[#allocation7 + $0x2c0] sm:$0xff]
    %v509 = vld [vmem:[#allocation7 + $0x2c8] sm:$0xff]
    %v510 = vld [vmem:[#allocation7 + $0x2d0] sm:$0xff]
    %v511 = vld [vmem:[#allocation7 + $0x2d8] sm:$0xff]
    %v512 = vld [vmem:[#allocation7 + $0x2e0] sm:$0xff]
    %v513 = vld [vmem:[#allocation7 + $0x2e8] sm:$0xff]
    %v514 = vld [vmem:[#allocation7 + $0x2f0] sm:$0xff]
    %v515 = vld [vmem:[#allocation7 + $0x2f8] sm:$0xff]
    %v516 = vld [vmem:[#allocation7 + $0x300] sm:$0xff]
    %v517 = vld [vmem:[#allocation7 + $0x308] sm:$0xff]
    %v518 = vld [vmem:[#allocation7 + $0x310] sm:$0xff]
    %v519 = vld [vmem:[#allocation7 + $0x318] sm:$0xff]
    %v520 = vld [vmem:[#allocation7 + $0x320] sm:$0xff]
    %v521 = vld [vmem:[#allocation7 + $0x328] sm:$0xff]
    %v522 = vld [vmem:[#allocation7 + $0x330] sm:$0xff]
    %v523 = vld [vmem:[#allocation7 + $0x338] sm:$0xff]
    %v524 = vld [vmem:[#allocation7 + $0x340] sm:$0xff]
    %v525 = vld [vmem:[#allocation7 + $0x348] sm:$0xff]
    %v526 = vld [vmem:[#allocation7 + $0x350] sm:$0xff]
    %v527 = vld [vmem:[#allocation7 + $0x358] sm:$0xff]
    %v528 = vld [vmem:[#allocation7 + $0x360] sm:$0xff]
    %v529 = vld [vmem:[#allocation7 + $0x368] sm:$0xff]
    %v530 = vld [vmem:[#allocation7 + $0x370] sm:$0xff]
    %v531 = vld [vmem:[#allocation7 + $0x378] sm:$0xff]
    %v532 = vld [vmem:[#allocation7 + $0x380] sm:$0xff]
    %v533 = vld [vmem:[#allocation7 + $0x388] sm:$0xff]
    %v534 = vld [vmem:[#allocation7 + $0x390] sm:$0xff]
    %v535 = vld [vmem:[#allocation7 + $0x398] sm:$0xff]
    %v536 = vld [vmem:[#allocation7 + $0x3a0] sm:$0xff]
    %v537 = vld [vmem:[#allocation7 + $0x3a8] sm:$0xff]
    %v538 = vld [vmem:[#allocation7 + $0x3b0] sm:$0xff]
    %v539 = vld [vmem:[#allocation7 + $0x3b8] sm:$0xff]
    %v540 = vld [vmem:[#allocation7 + $0x3c0] sm:$0xff]
    %v541 = vld [vmem:[#allocation7 + $0x3c8] sm:$0xff]
    %v542 = vld [vmem:[#allocation7 + $0x3d0] sm:$0xff]
    %v543 = vld [vmem:[#allocation7 + $0x3d8] sm:$0xff]
    %v544 = vld [vmem:[#allocation7 + $0x3e0] sm:$0xff]
    %v545 = vld [vmem:[#allocation7 + $0x3e8] sm:$0xff]
    %v546 = vld [vmem:[#allocation7 + $0x3f0] sm:$0xff]
    %v547 = vld [vmem:[#allocation7 + $0x3f8] sm:$0xff]
    %v548 = vld [vmem:[%s4] sm:$0x3]
    %v550 = vlaneseq
    %v551 = vshrl.u32 %v550, 7
    %v552 = vsub.s32 0, %v551
    %v553 = vrot.slane %v548, %v552
    %v554 = vlaneseq
    %v555 = vshrl.u32 %v554, 7
    %v556 = vsub.s32 1, %v555
    %v557 = vrot.slane %v548, %v556
    %560 = vmatprep.subr.mxu0 %v421
    %561 = vmatpush1.msra.mxu0 %v420
    %562 = vmatprep.subr.mxu0 %v423
    %563 = vmatpush1.msra.mxu0 %v422
    %564 = vmatprep.subr.mxu0 %v425
    %565 = vmatpush1.msra.mxu0 %v424
    %566 = vmatprep.subr.mxu0 %v427
    %567 = vmatpush1.msra.mxu0 %v426
    %568 = vmatprep.subr.mxu0 %v429
    %569 = vmatpush1.msra.mxu0 %v428
    %570 = vmatprep.subr.mxu0 %v431
    %571 = vmatpush1.msra.mxu0 %v430
    %572 = vmatprep.subr.mxu0 %v433
    %573 = vmatpush1.msra.mxu0 %v432
    %574 = vmatprep.subr.mxu0 %v435
    %575 = vmatpush1.msra.mxu0 %v434
    %576 = vmatprep.subr.mxu0 %v437
    %577 = vmatpush1.msra.mxu0 %v436
    %578 = vmatprep.subr.mxu0 %v439
    %579 = vmatpush1.msra.mxu0 %v438
    %580 = vmatprep.subr.mxu0 %v441
    %581 = vmatpush1.msra.mxu0 %v440
    %582 = vmatprep.subr.mxu0 %v443
    %583 = vmatpush1.msra.mxu0 %v442
    %584 = vmatprep.subr.mxu0 %v445
    %585 = vmatpush1.msra.mxu0 %v444
    %586 = vmatprep.subr.mxu0 %v447
    %587 = vmatpush1.msra.mxu0 %v446
    %588 = vmatprep.subr.mxu0 %v449
    %589 = vmatpush1.msra.mxu0 %v448
    %590 = vmatprep.subr.mxu0 %v451
    %591 = vmatpush1.msra.mxu0 %v450
    %592 = vmatprep.subr.mxu0 %v453
    %593 = vmatpush1.msra.mxu0 %v452
    %594 = vmatprep.subr.mxu0 %v455
    %595 = vmatpush1.msra.mxu0 %v454
    %596 = vmatprep.subr.mxu0 %v457
    %597 = vmatpush1.msra.mxu0 %v456
    %598 = vmatprep.subr.mxu0 %v459
    %599 = vmatpush1.msra.mxu0 %v458
    %600 = vmatprep.subr.mxu0 %v461
    %601 = vmatpush1.msra.mxu0 %v460
    %602 = vmatprep.subr.mxu0 %v463
    %603 = vmatpush1.msra.mxu0 %v462
    %604 = vmatprep.subr.mxu0 %v465
    %605 = vmatpush1.msra.mxu0 %v464
    %606 = vmatprep.subr.mxu0 %v467
    %607 = vmatpush1.msra.mxu0 %v466
    %608 = vmatprep.subr.mxu0 %v469
    %609 = vmatpush1.msra.mxu0 %v468
    %610 = vmatprep.subr.mxu0 %v471
    %611 = vmatpush1.msra.mxu0 %v470
    %612 = vmatprep.subr.mxu0 %v473
    %613 = vmatpush1.msra.mxu0 %v472
    %614 = vmatprep.subr.mxu0 %v475
    %615 = vmatpush1.msra.mxu0 %v474
    %616 = vmatprep.subr.mxu0 %v477
    %617 = vmatpush1.msra.mxu0 %v476
    %618 = vmatprep.subr.mxu0 %v479
    %619 = vmatpush1.msra.mxu0 %v478
    %620 = vmatprep.subr.mxu0 %v481
    %621 = vmatpush1.msra.mxu0 %v480
    %622 = vmatprep.subr.mxu0 %v483
    %623 = vmatpush1.msra.mxu0 %v482
    %624 = vmatprep.mubr.f32.mxu0 %v405
    %625 = vmatmul.mubr.f32.gmra.mrb[0].mxu0 %v404
    %v626 = vpop.f32.mrb[0].mxu0
    %v627 = vadd.f32 %v553, %v626
    %v628 = vpop.f32.mrb[0].mxu0
    %v629 = vadd.f32 %v557, %v628
    %630 = vmatprep.mubr.f32.mxu0 %v409
    %631 = vmatmul.mubr.f32.gmra.mrb[0].mxu0 %v408
    %v632 = vpop.f32.mrb[0].mxu0
    %v633 = vadd.f32 %v553, %v632
    %v634 = vpop.f32.mrb[0].mxu0
    %v635 = vadd.f32 %v557, %v634
    %636 = vmatprep.mubr.f32.mxu0 %v413
    %637 = vmatmul.mubr.f32.gmra.mrb[0].mxu0 %v412
    %v638 = vpop.f32.mrb[0].mxu0
    %v639 = vadd.f32 %v553, %v638
    %v640 = vpop.f32.mrb[0].mxu0
    %v641 = vadd.f32 %v557, %v640
    %642 = vmatprep.mubr.f32.mxu0 %v417
    %643 = vmatmul.mubr.f32.gmra.mrb[0].mxu0 %v416
    %v644 = vpop.f32.mrb[0].mxu0
    %v645 = vadd.f32 %v553, %v644
    %v646 = vpop.f32.mrb[0].mxu0
    %v647 = vadd.f32 %v557, %v646
    %648 = vdwg.mxu0
    %649 = vmatprep.subr.mxu0 %v485
    %650 = vmatpush1.msra.mxu0 %v484
    %651 = vmatprep.subr.mxu0 %v487
    %652 = vmatpush1.msra.mxu0 %v486
    %653 = vmatprep.subr.mxu0 %v489
    %654 = vmatpush1.msra.mxu0 %v488
    %655 = vmatprep.subr.mxu0 %v491
    %656 = vmatpush1.msra.mxu0 %v490
    %657 = vmatprep.subr.mxu0 %v493
    %658 = vmatpush1.msra.mxu0 %v492
    %659 = vmatprep.subr.mxu0 %v495
    %660 = vmatpush1.msra.mxu0 %v494
    %661 = vmatprep.subr.mxu0 %v497
    %662 = vmatpush1.msra.mxu0 %v496
    %663 = vmatprep.subr.mxu0 %v499
    %664 = vmatpush1.msra.mxu0 %v498
    %665 = vmatprep.subr.mxu0 %v501
    %666 = vmatpush1.msra.mxu0 %v500
    %667 = vmatprep.subr.mxu0 %v503
    %668 = vmatpush1.msra.mxu0 %v502
    %669 = vmatprep.subr.mxu0 %v505
    %670 = vmatpush1.msra.mxu0 %v504
    %671 = vmatprep.subr.mxu0 %v507
    %672 = vmatpush1.msra.mxu0 %v506
    %673 = vmatprep.subr.mxu0 %v509
    %674 = vmatpush1.msra.mxu0 %v508
    %675 = vmatprep.subr.mxu0 %v511
    %676 = vmatpush1.msra.mxu0 %v510
    %677 = vmatprep.subr.mxu0 %v513
    %678 = vmatpush1.msra.mxu0 %v512
    %679 = vmatprep.subr.mxu0 %v515
    %680 = vmatpush1.msra.mxu0 %v514
    %681 = vmatprep.subr.mxu0 %v517
    %682 = vmatpush1.msra.mxu0 %v516
    %683 = vmatprep.subr.mxu0 %v519
    %684 = vmatpush1.msra.mxu0 %v518
    %685 = vmatprep.subr.mxu0 %v521
    %686 = vmatpush1.msra.mxu0 %v520
    %687 = vmatprep.subr.mxu0 %v523
    %688 = vmatpush1.msra.mxu0 %v522
    %689 = vmatprep.subr.mxu0 %v525
    %690 = vmatpush1.msra.mxu0 %v524
    %691 = vmatprep.subr.mxu0 %v527
    %692 = vmatpush1.msra.mxu0 %v526
    %693 = vmatprep.subr.mxu0 %v529
    %694 = vmatpush1.msra.mxu0 %v528
    %695 = vmatprep.subr.mxu0 %v531
    %696 = vmatpush1.msra.mxu0 %v530
    %697 = vmatprep.subr.mxu0 %v533
    %698 = vmatpush1.msra.mxu0 %v532
    %699 = vmatprep.subr.mxu0 %v535
    %700 = vmatpush1.msra.mxu0 %v534
    %701 = vmatprep.subr.mxu0 %v537
    %702 = vmatpush1.msra.mxu0 %v536
    %703 = vmatprep.subr.mxu0 %v539
    %704 = vmatpush1.msra.mxu0 %v538
    %705 = vmatprep.subr.mxu0 %v541
    %706 = vmatpush1.msra.mxu0 %v540
    %707 = vmatprep.subr.mxu0 %v543
    %708 = vmatpush1.msra.mxu0 %v542
    %709 = vmatprep.subr.mxu0 %v545
    %710 = vmatpush1.msra.mxu0 %v544
    %711 = vmatprep.subr.mxu0 %v547
    %712 = vmatpush1.msra.mxu0 %v546
    %713 = vmatprep.mubr.f32.mxu0 %v407
    %714 = vmatmul.mubr.f32.gmra.mrb[0].mxu0 %v406
    %v715 = vpop.f32.mrb[0].mxu0
    %v716 = vadd.f32 %v627, %v715
    %v717 = vpop.f32.mrb[0].mxu0
    %v718 = vadd.f32 %v629, %v717
    %719 = vmatprep.mubr.f32.mxu0 %v411
    %720 = vmatmul.mubr.f32.gmra.mrb[0].mxu0 %v410
    %v721 = vpop.f32.mrb[0].mxu0
    %v722 = vadd.f32 %v633, %v721
    %v723 = vpop.f32.mrb[0].mxu0
    %v724 = vadd.f32 %v635, %v723
    %725 = vmatprep.mubr.f32.mxu0 %v415
    %726 = vmatmul.mubr.f32.gmra.mrb[0].mxu0 %v414
    %v727 = vpop.f32.mrb[0].mxu0
    %v728 = vadd.f32 %v639, %v727
    %v729 = vpop.f32.mrb[0].mxu0
    %v730 = vadd.f32 %v641, %v729
    %731 = vmatprep.mubr.f32.mxu0 %v419
    %732 = vmatmul.mubr.f32.gmra.mrb[0].mxu0 %v418
    %v733 = vpop.f32.mrb[0].mxu0
    %v734 = vadd.f32 %v645, %v733
    %v735 = vpop.f32.mrb[0].mxu0
    %v736 = vadd.f32 %v647, %v735
    %737 = vdwg.mxu0
    %v738 = vadd.f32 %v716, %v68
    %v739 = vadd.f32 %v718, %v69
    %v740 = vadd.f32 %v722, %v70
    %v741 = vadd.f32 %v724, %v71
    %v742 = vadd.f32 %v728, %v72
    %v743 = vadd.f32 %v730, %v73
    %v744 = vadd.f32 %v734, %v74
    %v745 = vadd.f32 %v736, %v75
    %v746 = vadd.f32 %v738, %v739
    %747 = vadd.xlane.f32.xlu0 %v746
    %v748 = vpop.xlane.xlu0 %747
    %v749 = vadd.f32 %v740, %v741
    %750 = vadd.xlane.f32.xlu0 %v749
    %v751 = vpop.xlane.xlu0 %750
    %v752 = vadd.f32 %v742, %v743
    %753 = vadd.xlane.f32.xlu0 %v752
    %v754 = vpop.xlane.xlu0 %753
    %v755 = vadd.f32 %v744, %v745
    %756 = vadd.xlane.f32.xlu0 %v755
    %v757 = vpop.xlane.xlu0 %756
    %v758 = vrcp.pop 256.0
    %v759 = vmul.f32 %v748, %v758
    %v760 = vmul.f32 %v751, %v758
    %v761 = vmul.f32 %v754, %v758
    %v762 = vmul.f32 %v757, %v758
    %v763 = vmul.f32 %v738, %v738
    %v764 = vmul.f32 %v739, %v739
    %v765 = vmul.f32 %v740, %v740
    %v766 = vmul.f32 %v741, %v741
    %v767 = vmul.f32 %v742, %v742
    %v768 = vmul.f32 %v743, %v743
    %v769 = vmul.f32 %v744, %v744
    %v770 = vmul.f32 %v745, %v745
    %v771 = vadd.f32 %v763, %v764
    %772 = vadd.xlane.f32.xlu0 %v771
    %v773 = vpop.xlane.xlu0 %772
    %v774 = vadd.f32 %v765, %v766
    %775 = vadd.xlane.f32.xlu0 %v774
    %v776 = vpop.xlane.xlu0 %775
    %v777 = vadd.f32 %v767, %v768
    %778 = vadd.xlane.f32.xlu0 %v777
    %v779 = vpop.xlane.xlu0 %778
    %v780 = vadd.f32 %v769, %v770
    %781 = vadd.xlane.f32.xlu0 %v780
    %v782 = vpop.xlane.xlu0 %781
    %v783 = vmul.f32 %v773, %v758
    %v784 = vmul.f32 %v776, %v758
    %v785 = vmul.f32 %v779, %v758
    %v786 = vmul.f32 %v782, %v758
    %v787 = vmul.f32 %v759, %v759
    %v788 = vmul.f32 %v760, %v760
    %v789 = vmul.f32 %v761, %v761
    %v790 = vmul.f32 %v762, %v762
    %v791 = vsub.f32 %v783, %v787
    %v792 = vsub.f32 %v784, %v788
    %v793 = vsub.f32 %v785, %v789
    %v794 = vsub.f32 %v786, %v790
    %v795 = vsub.f32 %v738, %v759
    %v796 = vsub.f32 %v739, %v759
    %v797 = vsub.f32 %v740, %v760
    %v798 = vsub.f32 %v741, %v760
    %v799 = vsub.f32 %v742, %v761
    %v800 = vsub.f32 %v743, %v761
    %v801 = vsub.f32 %v744, %v762
    %v802 = vsub.f32 %v745, %v762
    %v803 = vadd.f32 %v791, 1e-05
    %v804 = vadd.f32 %v792, 1e-05
    %v805 = vadd.f32 %v793, 1e-05
    %v806 = vadd.f32 %v794, 1e-05
    %v807 = vrsqrt.pop %v803
    %v808 = vrsqrt.pop %v804
    %v809 = vrsqrt.pop %v805
    %v810 = vrsqrt.pop %v806
    %v811 = vmul.f32 %v795, %v807
    %v812 = vmul.f32 %v796, %v807
    %v813 = vmul.f32 %v797, %v808
    %v814 = vmul.f32 %v798, %v808
    %v815 = vmul.f32 %v799, %v809
    %v816 = vmul.f32 %v800, %v809
    %v817 = vmul.f32 %v801, %v810
    %v818 = vmul.f32 %v802, %v810
    %v819 = vld [vmem:[%s5] sm:$0x3]
    %v821 = vlaneseq
    %v822 = vshrl.u32 %v821, 7
    %v823 = vsub.s32 0, %v822
    %v824 = vrot.slane %v819, %v823
    %v825 = vlaneseq
    %v826 = vshrl.u32 %v825, 7
    %v827 = vsub.s32 1, %v826
    %v828 = vrot.slane %v819, %v827
    %v831 = vmul.f32 %v811, %v824
    %v832 = vmul.f32 %v812, %v828
    %v833 = vmul.f32 %v813, %v824
    %v834 = vmul.f32 %v814, %v828
    %v835 = vmul.f32 %v815, %v824
    %v836 = vmul.f32 %v816, %v828
    %v837 = vmul.f32 %v817, %v824
    %v838 = vmul.f32 %v818, %v828
    %v839 = vld [vmem:[%s6] sm:$0x3]
    %v841 = vlaneseq
    %v842 = vshrl.u32 %v841, 7
    %v843 = vsub.s32 0, %v842
    %v844 = vrot.slane %v839, %v843
    %v845 = vlaneseq
    %v846 = vshrl.u32 %v845, 7
    %v847 = vsub.s32 1, %v846
    %v848 = vrot.slane %v839, %v847
    %v851 = vadd.f32 %v831, %v844
    %v852 = vadd.f32 %v832, %v848
    %v853 = vadd.f32 %v833, %v844
    %v854 = vadd.f32 %v834, %v848
    %v855 = vadd.f32 %v835, %v844
    %v856 = vadd.f32 %v836, %v848
    %v857 = vadd.f32 %v837, %v844
    %v858 = vadd.f32 %v838, %v848
    %859 = vst [vmem:[#allocation8] sm:$0xff] %v851
    %860 = vst [vmem:[#allocation8 + $0x8] sm:$0xff] %v852
    %861 = vst [vmem:[#allocation8 + $0x10] sm:$0xff] %v853
    %862 = vst [vmem:[#allocation8 + $0x18] sm:$0xff] %v854
    %863 = vst [vmem:[#allocation8 + $0x20] sm:$0xff] %v855
    %864 = vst [vmem:[#allocation8 + $0x28] sm:$0xff] %v856
    %865 = vst [vmem:[#allocation8 + $0x30] sm:$0xff] %v857
    %866 = vst [vmem:[#allocation8 + $0x38] sm:$0xff] %v858
    // Predicated region
    $region42: #{tpu_custom_call.1} parent=1 // pred_check
      _
    $region43: #{tpu_custom_call.1} parent=1 // pred_check_branch
      %868 = sbr.rel (0) target = $region45
    $region44: #{tpu_custom_call.1} parent=1 // pred_region
      %s870 = ssub.s32 1024, 1024
      %871 = vsyncadd [#allocation4], %s870
      %s872 = sshll.u32 [#allocation8], 4
      %s873 = int_to_ptr.vmem [resolvable:$true] %s872
      %878 = dma.vmem_to_hbm [thread:$0]  %s873, 1024, %s7, [#allocation4], 256, 256, 16
    $region45: #{tpu_custom_call.1} parent=1 // pred_fallthru
      _
    // Predicated region
    $region46: #{tpu_custom_call.1} parent=1 // pred_check
      _
    $region47: #{tpu_custom_call.1} parent=1 // pred_check_branch
      %880 = sbr.rel (0) target = $region49
    $region48: #{tpu_custom_call.1} parent=1 // pred_region
      %881 = dma.done [#allocation4], 1024
    $region49: #{tpu_custom_call.1} parent=1 // pred_fallthru
      _
    %882 = vsyncpa [#allocation3], 1
    %883 = vsyncpa [#allocation6], 1
    %884 = vsyncpa [#allocation4], 1

</llo_original>
